<compile_context>
chip_gen: v6e
topology: v6e:2x2x1
jax: 0.10.0
libtpu: 0.0.40
codegen_flags: <defaults>
</compile_context>

<pallas_src>
import jax
import jax.numpy as jnp
from jax.experimental import pallas as pl
from jax.experimental.pallas import tpu as pltpu

EPS = 1e-6


def _round_up(n, m):
    return ((n + m - 1) // m) * m


def _ffn_kernel(x_ref, g_ref, beta_ref, w1_ref, b1_ref, w2_ref, b2_ref, o_ref):
    # x_ref: (tm, d_in) row tile. gamma/beta/biases are f32 (1, d) rows.
    # w1/w2 are full (d_in, d_hid)/(d_hid, d_in) blocks already in the MXU
    # compute dtype (bf16 by default) -- no per-iteration weight casts here.
    xf = x_ref[...].astype(jnp.float32)

    # --- LayerNorm over last dim (biased variance, eps=1e-6), in f32 ---
    mu = jnp.mean(xf, axis=-1, keepdims=True)
    xc = xf - mu
    var = jnp.mean(xc * xc, axis=-1, keepdims=True)
    xn = xc * jax.lax.rsqrt(var + EPS)
    xn = xn * g_ref[...] + beta_ref[...]

    # --- w_1: Linear(d_in -> d_hid) + ReLU (bf16 MXU operands, f32 acc) ---
    h = jnp.dot(xn.astype(w1_ref.dtype), w1_ref[...],
                preferred_element_type=jnp.float32)
    h = jnp.maximum(h + b1_ref[...], 0.0)

    # --- w_2: Linear(d_hid -> d_in) ---
    y = jnp.dot(h.astype(w2_ref.dtype), w2_ref[...],
                preferred_element_type=jnp.float32)
    y = y + b2_ref[...]

    # --- dropout (eval: identity) + residual ---
    o_ref[...] = (y + xf).astype(o_ref.dtype)


def _make_ffn_call(M_pad, d_in, d_hid, tm, out_dtype, vmem_limit_bytes,
                   single_buffer_consts):
    # Weight / bias / gamma / beta blocks have a constant index_map; when
    # supported, request a single pipeline buffer for them (never re-fetched).
    const_kw = {"pipeline_mode": pl.Buffered(1)} if single_buffer_consts else {}

    in_specs = [
        pl.BlockSpec((tm, d_in), lambda i: (i, 0)),                 # x rows
        pl.BlockSpec((1, d_in), lambda i: (0, 0), **const_kw),      # gamma
        pl.BlockSpec((1, d_in), lambda i: (0, 0), **const_kw),      # beta
        pl.BlockSpec((d_in, d_hid), lambda i: (0, 0), **const_kw),  # w1 (T)
        pl.BlockSpec((1, d_hid), lambda i: (0, 0), **const_kw),     # b1
        pl.BlockSpec((d_hid, d_in), lambda i: (0, 0), **const_kw),  # w2 (T)
        pl.BlockSpec((1, d_in), lambda i: (0, 0), **const_kw),      # b2
    ]
    return pl.pallas_call(
        _ffn_kernel,
        out_shape=jax.ShapeDtypeStruct((M_pad, d_in), out_dtype),
        grid_spec=pltpu.PrefetchScalarGridSpec(
            num_scalar_prefetch=0,
            grid=(M_pad // tm,),
            in_specs=in_specs,
            out_specs=pl.BlockSpec((tm, d_in), lambda i: (i, 0)),
        ),
        compiler_params=pltpu.CompilerParams(
            dimension_semantics=("parallel",),
            vmem_limit_bytes=vmem_limit_bytes,
        ),
    )


# Flipped off (and cached) if this JAX build rejects pipeline_mode=pl.Buffered(1).
_SINGLE_BUFFER_CONSTS_OK = True


def positionwise_ffn(x, gamma, beta, w1, b1, w2, b2, *, tm=256,
                     compute_dtype=jnp.bfloat16):
    """x: (batch, seq, d_in). w1: (d_in, d_hid), w2: (d_hid, d_in)
    (i.e. nn.Linear weights already transposed). Biases/gamma/beta are 1-D."""
    global _SINGLE_BUFFER_CONSTS_OK

    batch, seq, d_in = x.shape
    d_hid = w1.shape[1]
    M = batch * seq

    # Row tile: big enough to fill the MXU and amortize grid-step overhead,
    # never bigger than (rounded-up) M, always a multiple of 8.
    tm_eff = min(_round_up(tm, 8), _round_up(M, 8))
    M_pad = _round_up(M, tm_eff)

    x2 = x.reshape(M, d_in)
    if M_pad != M:
        x2 = jnp.pad(x2, ((0, M_pad - M), (0, 0)))

    # Hoist all dtype conversions / reshapes out of the kernel hot path.
    w1c = w1.astype(compute_dtype)
    w2c = w2.astype(compute_dtype)
    g2 = gamma.reshape(1, d_in).astype(jnp.float32)
    be2 = beta.reshape(1, d_in).astype(jnp.float32)
    b1_2 = b1.reshape(1, d_hid).astype(jnp.float32)
    b2_2 = b2.reshape(1, d_in).astype(jnp.float32)

    # Scoped VMEM budget: weights (x2 in case they end up double-buffered)
    # + double-buffered row tiles (in + out) + f32 intermediates + headroom,
    # clamped to a range valid on every generation (v7x has 64 MiB / core).
    w_item = jnp.dtype(compute_dtype).itemsize
    x_item = jnp.dtype(x.dtype).itemsize
    weight_bytes = 2 * d_in * d_hid * w_item
    io_bytes = 2 * 2 * tm_eff * d_in * x_item
    act_bytes = 4 * tm_eff * (d_hid + 2 * d_in) * 4
    vmem_limit = int(min(max(2 * weight_bytes + io_bytes + act_bytes + (8 << 20),
                             32 << 20), 64 << 20))

    args = (x2, g2, be2, w1c, b1_2, w2c, b2_2)
    out = None
    if _SINGLE_BUFFER_CONSTS_OK:
        try:
            out = _make_ffn_call(M_pad, d_in, d_hid, tm_eff, x.dtype,
                                 vmem_limit, True)(*args)
        except Exception:
            _SINGLE_BUFFER_CONSTS_OK = False  # fall back to default buffering
    if out is None:
        out = _make_ffn_call(M_pad, d_in, d_hid, tm_eff, x.dtype,
                             vmem_limit, False)(*args)

    if M_pad != M:
        out = out[:M]
    return out.reshape(batch, seq, d_in)


def _reference(x, gamma, beta, w1, b1, w2, b2):
    xf = x.astype(jnp.float32)
    mu = jnp.mean(xf, axis=-1, keepdims=True)
    var = jnp.mean((xf - mu) ** 2, axis=-1, keepdims=True)
    xn = (xf - mu) * jax.lax.rsqrt(var + EPS) * gamma + beta
    h = jnp.maximum(xn @ w1 + b1, 0.0)
    y = h @ w2 + b2
    return (y + xf).astype(x.dtype)


if __name__ == "__main__":
    key = jax.random.PRNGKey(0)
    batch, seq, d_in, d_hid = 2, 8, 32, 64

    ks = jax.random.split(key, 7)
    x = jax.random.normal(ks[0], (batch, seq, d_in), dtype=jnp.float32)
    # nn.Linear stores weight as (d_out, d_in); we pass the transposed form.
    w1 = jax.random.normal(ks[1], (d_in, d_hid), dtype=jnp.float32) * 0.1
    b1 = jax.random.normal(ks[2], (d_hid,), dtype=jnp.float32) * 0.1
    w2 = jax.random.normal(ks[3], (d_hid, d_in), dtype=jnp.float32) * 0.1
    b2 = jax.random.normal(ks[4], (d_in,), dtype=jnp.float32) * 0.1
    gamma = 1.0 + 0.1 * jax.random.normal(ks[5], (d_in,), dtype=jnp.float32)
    beta = 0.1 * jax.random.normal(ks[6], (d_in,), dtype=jnp.float32)

    out = jax.block_until_ready(
        positionwise_ffn(x, gamma, beta, w1, b1, w2, b2))
    ref = _reference(x, gamma, beta, w1, b1, w2, b2)
    assert out.shape == x.shape
    # bf16 MXU operands + f32 accumulation vs. pure-f32 reference.
    assert jnp.allclose(out, ref, atol=3e-2, rtol=3e-2), "mismatch vs reference"

    # Ragged row count (exercises the pad-to-tile tail path).
    x_odd = x[:, :5, :]
    out_odd = jax.block_until_ready(
        positionwise_ffn(x_odd, gamma, beta, w1, b1, w2, b2))
    ref_odd = _reference(x_odd, gamma, beta, w1, b1, w2, b2)
    assert jnp.allclose(out_odd, ref_odd, atol=3e-2, rtol=3e-2)

    print("KERNEL_OK")
</pallas_src>

<mosaic_0001>
module attributes {stable_mosaic.version = 11 : i64} {
  func.func @_ffn_kernel(%arg0: i32, %arg1: memref<16x32xf32, #tpu.memory_space<vmem>>, %arg2: memref<1x32xf32, #tpu.memory_space<vmem>>, %arg3: memref<1x32xf32, #tpu.memory_space<vmem>>, %arg4: memref<32x64xbf16, #tpu.memory_space<vmem>>, %arg5: memref<1x64xf32, #tpu.memory_space<vmem>>, %arg6: memref<64x32xbf16, #tpu.memory_space<vmem>>, %arg7: memref<1x32xf32, #tpu.memory_space<vmem>>, %arg8: memref<16x32xf32, #tpu.memory_space<vmem>>) attributes {dimension_semantics = [#tpu.dimension_semantics<parallel>], iteration_bounds = array<i64: 1>, scalar_prefetch = 0 : i64, scratch_operands = 0 : i64, tpu.core_type = #tpu.core_type<tc>, window_params = [{transform_indices = @transform_0, window_bounds = array<i64: 16, 32>}, {pipeline_mode = #tpu.pipeline_mode<synchronous>, transform_indices = @transform_1, window_bounds = array<i64: 1, 32>}, {pipeline_mode = #tpu.pipeline_mode<synchronous>, transform_indices = @transform_2, window_bounds = array<i64: 1, 32>}, {pipeline_mode = #tpu.pipeline_mode<synchronous>, transform_indices = @transform_3, window_bounds = array<i64: 32, 64>}, {pipeline_mode = #tpu.pipeline_mode<synchronous>, transform_indices = @transform_4, window_bounds = array<i64: 1, 64>}, {pipeline_mode = #tpu.pipeline_mode<synchronous>, transform_indices = @transform_5, window_bounds = array<i64: 64, 32>}, {pipeline_mode = #tpu.pipeline_mode<synchronous>, transform_indices = @transform_6, window_bounds = array<i64: 1, 32>}, {transform_indices = @transform_7, window_bounds = array<i64: 16, 32>}]} {
    %c0 = arith.constant 0 : index
    %c0_0 = arith.constant 0 : index
    %0 = vector.load %arg1[%c0, %c0_0] : memref<16x32xf32, #tpu.memory_space<vmem>>, vector<16x32xf32>
    %cst = arith.constant dense<0.000000e+00> : vector<16xf32>
    %1 = vector.multi_reduction <add>, %0, %cst [1] : vector<16x32xf32> to vector<16xf32>
    %2 = vector.shape_cast %1 : vector<16xf32> to vector<16x1xf32>
    %cst_1 = arith.constant 3.200000e+01 : f32
    %3 = vector.broadcast %cst_1 : f32 to vector<16x1xf32>
    %4 = arith.divf %2, %3 : vector<16x1xf32>
    %5 = vector.broadcast %4 : vector<16x1xf32> to vector<16x32xf32>
    %6 = arith.subf %0, %5 : vector<16x32xf32>
    %7 = arith.mulf %6, %6 : vector<16x32xf32>
    %cst_2 = arith.constant dense<0.000000e+00> : vector<16xf32>
    %8 = vector.multi_reduction <add>, %7, %cst_2 [1] : vector<16x32xf32> to vector<16xf32>
    %9 = vector.shape_cast %8 : vector<16xf32> to vector<16x1xf32>
    %cst_3 = arith.constant 3.200000e+01 : f32
    %10 = vector.broadcast %cst_3 : f32 to vector<16x1xf32>
    %11 = arith.divf %9, %10 : vector<16x1xf32>
    %cst_4 = arith.constant 9.99999997E-7 : f32
    %12 = vector.broadcast %cst_4 : f32 to vector<16x1xf32>
    %13 = arith.addf %11, %12 : vector<16x1xf32>
    %14 = math.rsqrt %13 : vector<16x1xf32>
    %15 = vector.broadcast %14 : vector<16x1xf32> to vector<16x32xf32>
    %16 = arith.mulf %6, %15 : vector<16x32xf32>
    %c0_5 = arith.constant 0 : index
    %c0_6 = arith.constant 0 : index
    %17 = vector.load %arg2[%c0_5, %c0_6] : memref<1x32xf32, #tpu.memory_space<vmem>>, vector<1x32xf32>
    %18 = vector.broadcast %17 : vector<1x32xf32> to vector<16x32xf32>
    %19 = arith.mulf %16, %18 : vector<16x32xf32>
    %c0_7 = arith.constant 0 : index
    %c0_8 = arith.constant 0 : index
    %20 = vector.load %arg3[%c0_7, %c0_8] : memref<1x32xf32, #tpu.memory_space<vmem>>, vector<1x32xf32>
    %21 = vector.broadcast %20 : vector<1x32xf32> to vector<16x32xf32>
    %22 = arith.addf %19, %21 : vector<16x32xf32>
    %23 = arith.truncf %22 : vector<16x32xf32> to vector<16x32xbf16>
    %c0_9 = arith.constant 0 : index
    %c0_10 = arith.constant 0 : index
    %24 = vector.load %arg4[%c0_9, %c0_10] : memref<32x64xbf16, #tpu.memory_space<vmem>>, vector<32x64xbf16>
    %cst_11 = arith.constant dense<0.000000e+00> : vector<16x64xf32>
    %25 = tpu.matmul %23, %24, %cst_11 {dimension_numbers = #tpu.dot_dimension_numbers<[1], [0], [0], [1], [0, 0, 1, 1], [], []>} : vector<16x32xbf16>, vector<32x64xbf16>, vector<16x64xf32> -> vector<16x64xf32>
    %c0_12 = arith.constant 0 : index
    %c0_13 = arith.constant 0 : index
    %26 = vector.load %arg5[%c0_12, %c0_13] : memref<1x64xf32, #tpu.memory_space<vmem>>, vector<1x64xf32>
    %27 = vector.broadcast %26 : vector<1x64xf32> to vector<16x64xf32>
    %28 = arith.addf %25, %27 : vector<16x64xf32>
    %cst_14 = arith.constant 0.000000e+00 : f32
    %29 = vector.broadcast %cst_14 : f32 to vector<16x64xf32>
    %30 = arith.maximumf %28, %29 : vector<16x64xf32>
    %31 = arith.truncf %30 : vector<16x64xf32> to vector<16x64xbf16>
    %c0_15 = arith.constant 0 : index
    %c0_16 = arith.constant 0 : index
    %32 = vector.load %arg6[%c0_15, %c0_16] : memref<64x32xbf16, #tpu.memory_space<vmem>>, vector<64x32xbf16>
    %cst_17 = arith.constant dense<0.000000e+00> : vector<16x32xf32>
    %33 = tpu.matmul %31, %32, %cst_17 {dimension_numbers = #tpu.dot_dimension_numbers<[1], [0], [0], [1], [0, 0, 1, 1], [], []>} : vector<16x64xbf16>, vector<64x32xbf16>, vector<16x32xf32> -> vector<16x32xf32>
    %c0_18 = arith.constant 0 : index
    %c0_19 = arith.constant 0 : index
    %34 = vector.load %arg7[%c0_18, %c0_19] : memref<1x32xf32, #tpu.memory_space<vmem>>, vector<1x32xf32>
    %35 = vector.broadcast %34 : vector<1x32xf32> to vector<16x32xf32>
    %36 = arith.addf %33, %35 : vector<16x32xf32>
    %37 = arith.addf %36, %0 : vector<16x32xf32>
    %c0_20 = arith.constant 0 : index
    %c0_21 = arith.constant 0 : index
    %38 = vector.load %arg8[%c0_20, %c0_21] : memref<16x32xf32, #tpu.memory_space<vmem>>, vector<16x32xf32>
    tpu.vector_store %arg8[%c0_20, %c0_21], %37 {strides = array<i32>} : memref<16x32xf32, #tpu.memory_space<vmem>>, vector<16x32xf32>,
    return
  }
  func.func @transform_0(%arg0: i32) -> (i32, i32) {
    %c0_i32 = arith.constant 0 : i32
    %c0_i32_0 = arith.constant 0 : i32
    return %arg0, %c0_i32 : i32, i32
  }
  func.func @transform_1(%arg0: i32) -> (i32, i32) {
    %c0_i32 = arith.constant 0 : i32
    %c0_i32_0 = arith.constant 0 : i32
    %c0_i32_1 = arith.constant 0 : i32
    return %c0_i32, %c0_i32_0 : i32, i32
  }
  func.func @transform_2(%arg0: i32) -> (i32, i32) {
    %c0_i32 = arith.constant 0 : i32
    %c0_i32_0 = arith.constant 0 : i32
    %c0_i32_1 = arith.constant 0 : i32
    return %c0_i32, %c0_i32_0 : i32, i32
  }
  func.func @transform_3(%arg0: i32) -> (i32, i32) {
    %c0_i32 = arith.constant 0 : i32
    %c0_i32_0 = arith.constant 0 : i32
    %c0_i32_1 = arith.constant 0 : i32
    return %c0_i32, %c0_i32_0 : i32, i32
  }
  func.func @transform_4(%arg0: i32) -> (i32, i32) {
    %c0_i32 = arith.constant 0 : i32
    %c0_i32_0 = arith.constant 0 : i32
    %c0_i32_1 = arith.constant 0 : i32
    return %c0_i32, %c0_i32_0 : i32, i32
  }
  func.func @transform_5(%arg0: i32) -> (i32, i32) {
    %c0_i32 = arith.constant 0 : i32
    %c0_i32_0 = arith.constant 0 : i32
    %c0_i32_1 = arith.constant 0 : i32
    return %c0_i32, %c0_i32_0 : i32, i32
  }
  func.func @transform_6(%arg0: i32) -> (i32, i32) {
    %c0_i32 = arith.constant 0 : i32
    %c0_i32_0 = arith.constant 0 : i32
    %c0_i32_1 = arith.constant 0 : i32
    return %c0_i32, %c0_i32_0 : i32, i32
  }
  func.func @transform_7(%arg0: i32) -> (i32, i32) {
    %c0_i32 = arith.constant 0 : i32
    %c0_i32_0 = arith.constant 0 : i32
    return %arg0, %c0_i32 : i32, i32
  }
}

module attributes {stable_mosaic.version = 11 : i64} {
  func.func @_ffn_kernel(%arg0: i32, %arg1: memref<16x32xf32, #tpu.memory_space<vmem>>, %arg2: memref<1x32xf32, #tpu.memory_space<vmem>>, %arg3: memref<1x32xf32, #tpu.memory_space<vmem>>, %arg4: memref<32x64xbf16, #tpu.memory_space<vmem>>, %arg5: memref<1x64xf32, #tpu.memory_space<vmem>>, %arg6: memref<64x32xbf16, #tpu.memory_space<vmem>>, %arg7: memref<1x32xf32, #tpu.memory_space<vmem>>, %arg8: memref<16x32xf32, #tpu.memory_space<vmem>>) attributes {dimension_semantics = [#tpu.dimension_semantics<parallel>], iteration_bounds = array<i64: 1>, scalar_prefetch = 0 : i64, scratch_operands = 0 : i64, tpu.core_type = #tpu.core_type<tc>, window_params = [{transform_indices = @transform_0, window_bounds = array<i64: 16, 32>}, {pipeline_mode = #tpu.pipeline_mode<synchronous>, transform_indices = @transform_1, window_bounds = array<i64: 1, 32>}, {pipeline_mode = #tpu.pipeline_mode<synchronous>, transform_indices = @transform_2, window_bounds = array<i64: 1, 32>}, {pipeline_mode = #tpu.pipeline_mode<synchronous>, transform_indices = @transform_3, window_bounds = array<i64: 32, 64>}, {pipeline_mode = #tpu.pipeline_mode<synchronous>, transform_indices = @transform_4, window_bounds = array<i64: 1, 64>}, {pipeline_mode = #tpu.pipeline_mode<synchronous>, transform_indices = @transform_5, window_bounds = array<i64: 64, 32>}, {pipeline_mode = #tpu.pipeline_mode<synchronous>, transform_indices = @transform_6, window_bounds = array<i64: 1, 32>}, {transform_indices = @transform_7, window_bounds = array<i64: 16, 32>}]} {
    %c0 = arith.constant 0 : index
    %c0_0 = arith.constant 0 : index
    %0 = vector.load %arg1[%c0, %c0_0] : memref<16x32xf32, #tpu.memory_space<vmem>>, vector<16x32xf32>
    %cst = arith.constant dense<0.000000e+00> : vector<16xf32>
    %1 = vector.multi_reduction <add>, %0, %cst [1] : vector<16x32xf32> to vector<16xf32>
    %2 = vector.shape_cast %1 : vector<16xf32> to vector<16x1xf32>
    %cst_1 = arith.constant 3.200000e+01 : f32
    %3 = vector.broadcast %cst_1 : f32 to vector<16x1xf32>
    %4 = arith.divf %2, %3 : vector<16x1xf32>
    %5 = vector.broadcast %4 : vector<16x1xf32> to vector<16x32xf32>
    %6 = arith.subf %0, %5 : vector<16x32xf32>
    %7 = arith.mulf %6, %6 : vector<16x32xf32>
    %cst_2 = arith.constant dense<0.000000e+00> : vector<16xf32>
    %8 = vector.multi_reduction <add>, %7, %cst_2 [1] : vector<16x32xf32> to vector<16xf32>
    %9 = vector.shape_cast %8 : vector<16xf32> to vector<16x1xf32>
    %cst_3 = arith.constant 3.200000e+01 : f32
    %10 = vector.broadcast %cst_3 : f32 to vector<16x1xf32>
    %11 = arith.divf %9, %10 : vector<16x1xf32>
    %cst_4 = arith.constant 9.99999997E-7 : f32
    %12 = vector.broadcast %cst_4 : f32 to vector<16x1xf32>
    %13 = arith.addf %11, %12 : vector<16x1xf32>
    %14 = math.rsqrt %13 : vector<16x1xf32>
    %15 = vector.broadcast %14 : vector<16x1xf32> to vector<16x32xf32>
    %16 = arith.mulf %6, %15 : vector<16x32xf32>
    %c0_5 = arith.constant 0 : index
    %c0_6 = arith.constant 0 : index
    %17 = vector.load %arg2[%c0_5, %c0_6] : memref<1x32xf32, #tpu.memory_space<vmem>>, vector<1x32xf32>
    %18 = vector.broadcast %17 : vector<1x32xf32> to vector<16x32xf32>
    %19 = arith.mulf %16, %18 : vector<16x32xf32>
    %c0_7 = arith.constant 0 : index
    %c0_8 = arith.constant 0 : index
    %20 = vector.load %arg3[%c0_7, %c0_8] : memref<1x32xf32, #tpu.memory_space<vmem>>, vector<1x32xf32>
    %21 = vector.broadcast %20 : vector<1x32xf32> to vector<16x32xf32>
    %22 = arith.addf %19, %21 : vector<16x32xf32>
    %23 = arith.truncf %22 : vector<16x32xf32> to vector<16x32xbf16>
    %c0_9 = arith.constant 0 : index
    %c0_10 = arith.constant 0 : index
    %24 = vector.load %arg4[%c0_9, %c0_10] : memref<32x64xbf16, #tpu.memory_space<vmem>>, vector<32x64xbf16>
    %cst_11 = arith.constant dense<0.000000e+00> : vector<16x64xf32>
    %25 = tpu.matmul %23, %24, %cst_11 {dimension_numbers = #tpu.dot_dimension_numbers<[1], [0], [0], [1], [0, 0, 1, 1], [], []>} : vector<16x32xbf16>, vector<32x64xbf16>, vector<16x64xf32> -> vector<16x64xf32>
    %c0_12 = arith.constant 0 : index
    %c0_13 = arith.constant 0 : index
    %26 = vector.load %arg5[%c0_12, %c0_13] : memref<1x64xf32, #tpu.memory_space<vmem>>, vector<1x64xf32>
    %27 = vector.broadcast %26 : vector<1x64xf32> to vector<16x64xf32>
    %28 = arith.addf %25, %27 : vector<16x64xf32>
    %cst_14 = arith.constant 0.000000e+00 : f32
    %29 = vector.broadcast %cst_14 : f32 to vector<16x64xf32>
    %30 = arith.maximumf %28, %29 : vector<16x64xf32>
    %31 = arith.truncf %30 : vector<16x64xf32> to vector<16x64xbf16>
    %c0_15 = arith.constant 0 : index
    %c0_16 = arith.constant 0 : index
    %32 = vector.load %arg6[%c0_15, %c0_16] : memref<64x32xbf16, #tpu.memory_space<vmem>>, vector<64x32xbf16>
    %cst_17 = arith.constant dense<0.000000e+00> : vector<16x32xf32>
    %33 = tpu.matmul %31, %32, %cst_17 {dimension_numbers = #tpu.dot_dimension_numbers<[1], [0], [0], [1], [0, 0, 1, 1], [], []>} : vector<16x64xbf16>, vector<64x32xbf16>, vector<16x32xf32> -> vector<16x32xf32>
    %c0_18 = arith.constant 0 : index
    %c0_19 = arith.constant 0 : index
    %34 = vector.load %arg7[%c0_18, %c0_19] : memref<1x32xf32, #tpu.memory_space<vmem>>, vector<1x32xf32>
    %35 = vector.broadcast %34 : vector<1x32xf32> to vector<16x32xf32>
    %36 = arith.addf %33, %35 : vector<16x32xf32>
    %37 = arith.addf %36, %0 : vector<16x32xf32>
    %c0_20 = arith.constant 0 : index
    %c0_21 = arith.constant 0 : index
    %38 = vector.load %arg8[%c0_20, %c0_21] : memref<16x32xf32, #tpu.memory_space<vmem>>, vector<16x32xf32>
    tpu.vector_store %arg8[%c0_20, %c0_21], %37 {strides = array<i32>} : memref<16x32xf32, #tpu.memory_space<vmem>>, vector<16x32xf32>,
    return
  }
  func.func @transform_0(%arg0: i32) -> (i32, i32) {
    %c0_i32 = arith.constant 0 : i32
    %c0_i32_0 = arith.constant 0 : i32
    return %arg0, %c0_i32 : i32, i32
  }
  func.func @transform_1(%arg0: i32) -> (i32, i32) {
    %c0_i32 = arith.constant 0 : i32
    %c0_i32_0 = arith.constant 0 : i32
    %c0_i32_1 = arith.constant 0 : i32
    return %c0_i32, %c0_i32_0 : i32, i32
  }
  func.func @transform_2(%arg0: i32) -> (i32, i32) {
    %c0_i32 = arith.constant 0 : i32
    %c0_i32_0 = arith.constant 0 : i32
    %c0_i32_1 = arith.constant 0 : i32
    return %c0_i32, %c0_i32_0 : i32, i32
  }
  func.func @transform_3(%arg0: i32) -> (i32, i32) {
    %c0_i32 = arith.constant 0 : i32
    %c0_i32_0 = arith.constant 0 : i32
    %c0_i32_1 = arith.constant 0 : i32
    return %c0_i32, %c0_i32_0 : i32, i32
  }
  func.func @transform_4(%arg0: i32) -> (i32, i32) {
    %c0_i32 = arith.constant 0 : i32
    %c0_i32_0 = arith.constant 0 : i32
    %c0_i32_1 = arith.constant 0 : i32
    return %c0_i32, %c0_i32_0 : i32, i32
  }
  func.func @transform_5(%arg0: i32) -> (i32, i32) {
    %c0_i32 = arith.constant 0 : i32
    %c0_i32_0 = arith.constant 0 : i32
    %c0_i32_1 = arith.constant 0 : i32
    return %c0_i32, %c0_i32_0 : i32, i32
  }
  func.func @transform_6(%arg0: i32) -> (i32, i32) {
    %c0_i32 = arith.constant 0 : i32
    %c0_i32_0 = arith.constant 0 : i32
    %c0_i32_1 = arith.constant 0 : i32
    return %c0_i32, %c0_i32_0 : i32, i32
  }
  func.func @transform_7(%arg0: i32) -> (i32, i32) {
    %c0_i32 = arith.constant 0 : i32
    %c0_i32_0 = arith.constant 0 : i32
    return %arg0, %c0_i32 : i32, i32
  }
}

</mosaic_0001>

<llo_original>
// kernel: tpu_custom_call.1
$region0: #{tpu_custom_call.1}
  #allocation0 [shape = 'u32[]', space=smem, size = 0x4, offset = 0x4, fixed_abs, tag = 'smem constant byte address 0x4 - core index']
  #allocation1 [shape = 'u32[144,128]{1,0:T(1,128)}', space=vmem, size = 0x12000, scoped, tag = 'internal scratch']
  %s0 = inlined_call_operand.vmem [shape: f32[16,32], index: 0, kind: input, shape index: {}]
  %s1 = inlined_call_operand.vmem [shape: f32[1,32], index: 1, kind: input, shape index: {}]
  %s2 = inlined_call_operand.vmem [shape: f32[1,32], index: 2, kind: input, shape index: {}]
  %s3 = inlined_call_operand.vmem [shape: bf16[32,64], index: 3, kind: input, shape index: {}]
  %s4 = inlined_call_operand.vmem [shape: f32[1,64], index: 4, kind: input, shape index: {}]
  %s5 = inlined_call_operand.vmem [shape: bf16[64,32], index: 5, kind: input, shape index: {}]
  %s6 = inlined_call_operand.vmem [shape: f32[1,32], index: 6, kind: input, shape index: {}]
  %s7 = inlined_call_operand.hbm [shape: f32[16,32], index: 7, kind: output, shape index: {}]
  %s8 = sld [smem:[#allocation0]]
  $region38: #{tpu_custom_call.1} parent=0
    _
  %s10 = ssub.s32 1, %s8
  %s11 = scalar_select 0, %s10, %s8
  $region1: #{tpu_custom_call.1} parent=0
    #allocation2 [shape = 'u8[8192]{0}', space=vmem, size = 0x2000, scoped, tag = 'output window, operand 0, single buffered']
    #allocation3 [shape = 's32[1]{0}', space=sflag, size = 0x4, scoped, tag = 'scoped memory for tpu_custom_call.1']
    %12 = vsyncpa [#allocation3], 0
    // Predicated region
    $region2: #{tpu_custom_call.1} parent=1 // pred_check
      _
    $region3: #{tpu_custom_call.1} parent=1 // pred_check_branch
      %14 = sbr.rel (0) target = $region5
    $region4: #{tpu_custom_call.1} parent=1 // pred_region
      _
    $region5: #{tpu_custom_call.1} parent=1 // pred_fallthru
      _
    // Predicated region
    $region6: #{tpu_custom_call.1} parent=1 // pred_check
      _
    $region7: #{tpu_custom_call.1} parent=1 // pred_check_branch
      %16 = sbr.rel (0) target = $region9
    $region8: #{tpu_custom_call.1} parent=1 // pred_region
      _
    $region9: #{tpu_custom_call.1} parent=1 // pred_fallthru
      _
    // Predicated region
    $region10: #{tpu_custom_call.1} parent=1 // pred_check
      _
    $region11: #{tpu_custom_call.1} parent=1 // pred_check_branch
      %18 = sbr.rel (0) target = $region13
    $region12: #{tpu_custom_call.1} parent=1 // pred_region
      _
    $region13: #{tpu_custom_call.1} parent=1 // pred_fallthru
      _
    // Predicated region
    $region14: #{tpu_custom_call.1} parent=1 // pred_check
      _
    $region15: #{tpu_custom_call.1} parent=1 // pred_check_branch
      %20 = sbr.rel (0) target = $region17
    $region16: #{tpu_custom_call.1} parent=1 // pred_region
      _
    $region17: #{tpu_custom_call.1} parent=1 // pred_fallthru
      _
    // Predicated region
    $region18: #{tpu_custom_call.1} parent=1 // pred_check
      _
    $region19: #{tpu_custom_call.1} parent=1 // pred_check_branch
      %22 = sbr.rel (0) target = $region21
    $region20: #{tpu_custom_call.1} parent=1 // pred_region
      _
    $region21: #{tpu_custom_call.1} parent=1 // pred_fallthru
      _
    // Predicated region
    $region22: #{tpu_custom_call.1} parent=1 // pred_check
      _
    $region23: #{tpu_custom_call.1} parent=1 // pred_check_branch
      %24 = sbr.rel (0) target = $region25
    $region24: #{tpu_custom_call.1} parent=1 // pred_region
      _
    $region25: #{tpu_custom_call.1} parent=1 // pred_fallthru
      _
    // Predicated region
    $region26: #{tpu_custom_call.1} parent=1 // pred_check
      _
    $region27: #{tpu_custom_call.1} parent=1 // pred_check_branch
      %26 = sbr.rel (0) target = $region29
    $region28: #{tpu_custom_call.1} parent=1 // pred_region
      _
    $region29: #{tpu_custom_call.1} parent=1 // pred_fallthru
      _
    %v28 = vld [vmem:[%s0] sm:$0xff]
    %v29 = vld [vmem:[%s0 + $0x8] sm:$0xff]
    %vm30 = vcmask 261120
    %v31 = vsel %vm30, %v28, 0.0
    %32 = vadd.xlane.f32.xlu0 %v31
    %v33 = vpop.xlane.xlu0 %32
    %v34 = vsel %vm30, %v29, 0.0
    %35 = vadd.xlane.f32.xlu0 %v34
    %v36 = vpop.xlane.xlu0 %35
    %v37 = vrcp.pop 32.0
    %v38 = vmul.f32 %v33, %v37
    %v39 = vmul.f32 %v36, %v37
    %v40 = vsub.f32 %v28, %v38
    %v41 = vsub.f32 %v29, %v39
    %v42 = vmul.f32 %v40, %v40
    %v43 = vmul.f32 %v41, %v41
    %v44 = vsel %vm30, %v42, 0.0
    %45 = vadd.xlane.f32.xlu0 %v44
    %v46 = vpop.xlane.xlu0 %45
    %v47 = vsel %vm30, %v43, 0.0
    %48 = vadd.xlane.f32.xlu0 %v47
    %v49 = vpop.xlane.xlu0 %48
    %v50 = vmul.f32 %v46, %v37
    %v51 = vmul.f32 %v49, %v37
    %v52 = vadd.f32 %v50, 1e-06
    %v53 = vadd.f32 %v51, 1e-06
    %v54 = vrsqrt.pop %v52
    %v55 = vrsqrt.pop %v53
    %v56 = vmul.f32 %v40, %v54
    %v57 = vmul.f32 %v41, %v55
    %v58 = vld [vmem:[%s1] sm:$0x1]
    %v60 = vlaneseq
    %v61 = vshrl.u32 %v60, 7
    %v62 = vsub.s32 0, %v61
    %v63 = vrot.slane %v58, %v62
    %v65 = vmul.f32 %v56, %v63
    %v66 = vmul.f32 %v57, %v63
    %v67 = vld [vmem:[%s2] sm:$0x1]
    %v69 = vlaneseq
    %v70 = vshrl.u32 %v69, 7
    %v71 = vsub.s32 0, %v70
    %v72 = vrot.slane %v67, %v71
    %v74 = vadd.f32 %v65, %v72
    %v75 = vadd.f32 %v66, %v72
    %v76 = vpack.c.bf16 %v75, %v74
    %v77 = vld [vmem:[%s3] sm:$0xf]
    %v78 = vld [vmem:[%s3 + $0x4] sm:$0xf]
    %v79 = vld [vmem:[%s3 + $0x8] sm:$0xf]
    %v80 = vld [vmem:[%s3 + $0xc] sm:$0xf]
    %v81 = vld [vmem:[%s4] sm:$0x1]
    %v83 = vlaneseq
    %v84 = vshrl.u32 %v83, 7
    %v85 = vsub.s32 0, %v84
    %v86 = vrot.slane %v81, %v85
    %v92 = vunpack.c.l.b16 %v77
    %v93 = vunpack.c.l.b16 %v78
    %v94 = vunpack.c.l.b16 %v79
    %v95 = vunpack.c.l.b16 %v80
    %v96 = vpack.c.b16 %v93, %v92
    %v97 = vpack.c.b16 %v95, %v94
    %v101 = vsel %vm30, %v76, 0
    %103 = vmatprep.subr.bf16.mxu0 0
    %104 = vmatpush1.bf16.msra.mxu0 0
    %105 = vmatprep.subr.bf16.mxu0 0
    %106 = vmatpush1.bf16.msra.mxu0 0
    %107 = vmatprep.subr.bf16.mxu0 0
    %108 = vmatpush1.bf16.msra.mxu0 0
    %109 = vmatprep.subr.bf16.mxu0 0
    %110 = vmatpush1.bf16.msra.mxu0 0
    %111 = vmatprep.subr.bf16.mxu0 0
    %112 = vmatpush1.bf16.msra.mxu0 0
    %113 = vmatprep.subr.bf16.mxu0 0
    %114 = vmatpush1.bf16.msra.mxu0 0
    %115 = vmatprep.subr.bf16.mxu0 0
    %116 = vmatpush1.bf16.msra.mxu0 %v97
    %117 = vmatprep.subr.bf16.mxu0 0
    %118 = vmatpush1.bf16.msra.mxu0 %v96
    %119 = vmatprep.subr.bf16.mxu0 0
    %120 = vmatpush2.bf16.msra.mxu0 0
    %121 = vmatprep.subr.bf16.mxu0 0
    %122 = vmatpush2.bf16.msra.mxu0 0
    %123 = vmatprep.subr.bf16.mxu0 0
    %124 = vmatpush2.bf16.msra.mxu0 0
    %125 = vmatprep.subr.bf16.mxu0 0
    %126 = vmatpush2.bf16.msra.mxu0 0
    %127 = vmatprep.subr.bf16.mxu0 0
    %128 = vmatpush2.bf16.msra.mxu0 0
    %129 = vmatprep.subr.bf16.mxu0 0
    %130 = vmatpush2.bf16.msra.mxu0 0
    %131 = vmatprep.subr.bf16.mxu0 0
    %132 = vmatpush2.bf16.msra.mxu0 0
    %133 = vmatprep.subr.bf16.mxu0 0
    %134 = vmatpush2.bf16.msra.mxu0 0
    %135 = vmatprep.mubr.bf16.mxu0 0
    %136 = vmatmul.mubr.bf16.gmra.mxu0 %v101
    %v137 = vpop.f32.mrf.mxu0
    %v138 = vadd.f32 %v86, %v137
    %v139 = vpop.f32.mrf.mxu0
    %v140 = vpop.f32.mrf.mxu0
    %v141 = vadd.f32 %v86, %v140
    %v142 = vpop.f32.mrf.mxu0
    %143 = vdwg.mxu0
    %v144 = vmax.f32 %v138, 0.0
    %v145 = vmax.f32 %v141, 0.0
    %v146 = vpack.c.bf16 %v145, %v144
    %v147 = vld [vmem:[%s5] sm:$0xf]
    %v148 = vld [vmem:[%s5 + $0x4] sm:$0xf]
    %v149 = vld [vmem:[%s5 + $0x8] sm:$0xf]
    %v150 = vld [vmem:[%s5 + $0xc] sm:$0xf]
    %v151 = vld [vmem:[%s5 + $0x10] sm:$0xf]
    %v152 = vld [vmem:[%s5 + $0x14] sm:$0xf]
    %v153 = vld [vmem:[%s5 + $0x18] sm:$0xf]
    %v154 = vld [vmem:[%s5 + $0x1c] sm:$0xf]
    %v155 = vld [vmem:[%s6] sm:$0x1]
    %v157 = vlaneseq
    %v158 = vshrl.u32 %v157, 7
    %v159 = vsub.s32 0, %v158
    %v160 = vrot.slane %v155, %v159
    %v170 = vunpack.c.l.b16 %v147
    %v171 = vunpack.c.l.b16 %v148
    %v172 = vunpack.c.l.b16 %v149
    %v173 = vunpack.c.l.b16 %v150
    %v174 = vunpack.c.l.b16 %v151
    %v175 = vunpack.c.l.b16 %v152
    %v176 = vunpack.c.l.b16 %v153
    %v177 = vunpack.c.l.b16 %v154
    %v178 = vpack.c.b16 %v171, %v170
    %v179 = vpack.c.b16 %v173, %v172
    %v180 = vpack.c.b16 %v175, %v174
    %v181 = vpack.c.b16 %v177, %v176
    %vm186 = vcmask 523264
    %v188 = vsel %vm186, %v146, 0
    %190 = vmatprep.subr.bf16.mxu0 0
    %191 = vmatpush1.bf16.msra.mxu0 0
    %192 = vmatprep.subr.bf16.mxu0 0
    %193 = vmatpush1.bf16.msra.mxu0 0
    %194 = vmatprep.subr.bf16.mxu0 0
    %195 = vmatpush1.bf16.msra.mxu0 0
    %196 = vmatprep.subr.bf16.mxu0 0
    %197 = vmatpush1.bf16.msra.mxu0 0
    %198 = vmatprep.subr.bf16.mxu0 0
    %199 = vmatpush1.bf16.msra.mxu0 %v181
    %200 = vmatprep.subr.bf16.mxu0 0
    %201 = vmatpush1.bf16.msra.mxu0 %v180
    %202 = vmatprep.subr.bf16.mxu0 0
    %203 = vmatpush1.bf16.msra.mxu0 %v179
    %204 = vmatprep.subr.bf16.mxu0 0
    %205 = vmatpush1.bf16.msra.mxu0 %v178
    %206 = vmatprep.subr.bf16.mxu0 0
    %207 = vmatpush2.bf16.msra.mxu0 0
    %208 = vmatprep.subr.bf16.mxu0 0
    %209 = vmatpush2.bf16.msra.mxu0 0
    %210 = vmatprep.subr.bf16.mxu0 0
    %211 = vmatpush2.bf16.msra.mxu0 0
    %212 = vmatprep.subr.bf16.mxu0 0
    %213 = vmatpush2.bf16.msra.mxu0 0
    %214 = vmatprep.subr.bf16.mxu0 0
    %215 = vmatpush2.bf16.msra.mxu0 0
    %216 = vmatprep.subr.bf16.mxu0 0
    %217 = vmatpush2.bf16.msra.mxu0 0
    %218 = vmatprep.subr.bf16.mxu0 0
    %219 = vmatpush2.bf16.msra.mxu0 0
    %220 = vmatprep.subr.bf16.mxu0 0
    %221 = vmatpush2.bf16.msra.mxu0 0
    %222 = vmatprep.mubr.bf16.mxu0 0
    %223 = vmatmul.mubr.bf16.gmra.mxu0 %v188
    %v224 = vpop.f32.mrf.mxu0
    %v225 = vadd.f32 %v160, %v224
    %v226 = vpop.f32.mrf.mxu0
    %v227 = vpop.f32.mrf.mxu0
    %v228 = vadd.f32 %v160, %v227
    %v229 = vpop.f32.mrf.mxu0
    %230 = vdwg.mxu0
    %v231 = vadd.f32 %v225, %v28
    %v232 = vadd.f32 %v228, %v29
    %233 = vst.msk [vmem:[#allocation2] sm:$0xff] %vm30, %v231
    %234 = vst.msk [vmem:[#allocation2 + $0x8] sm:$0xff] %vm30, %v232
    // Predicated region
    $region30: #{tpu_custom_call.1} parent=1 // pred_check
      _
    $region31: #{tpu_custom_call.1} parent=1 // pred_check_branch
      %236 = sbr.rel (0) target = $region33
    $region32: #{tpu_custom_call.1} parent=1 // pred_region
      %s238 = ssub.s32 256, 256
      %239 = vsyncadd [#allocation3], %s238
      %s240 = sshll.u32 [#allocation2], 4
      %s241 = int_to_ptr.vmem [resolvable:$true] %s240
      %246 = dma.vmem_to_hbm [thread:$0]  %s241, 256, %s7, [#allocation3], 128, 128, 8
    $region33: #{tpu_custom_call.1} parent=1 // pred_fallthru
      _
    // Predicated region
    $region34: #{tpu_custom_call.1} parent=1 // pred_check
      _
    $region35: #{tpu_custom_call.1} parent=1 // pred_check_branch
      %248 = sbr.rel (0) target = $region37
    $region36: #{tpu_custom_call.1} parent=1 // pred_region
      %249 = dma.done [#allocation3], 256
    $region37: #{tpu_custom_call.1} parent=1 // pred_fallthru
      _
    %250 = vsyncpa [#allocation3], 1

// kernel: tpu_custom_call.1
$region0: #{tpu_custom_call.1}
  #allocation0 [shape = 'u32[]', space=smem, size = 0x4, offset = 0x4, fixed_abs, tag = 'smem constant byte address 0x4 - core index']
  #allocation1 [shape = 'u32[144,128]{1,0:T(1,128)}', space=vmem, size = 0x12000, scoped, tag = 'internal scratch']
  %s0 = inlined_call_operand.vmem [shape: f32[16,32], index: 0, kind: input, shape index: {}]
  %s1 = inlined_call_operand.vmem [shape: f32[1,32], index: 1, kind: input, shape index: {}]
  %s2 = inlined_call_operand.vmem [shape: f32[1,32], index: 2, kind: input, shape index: {}]
  %s3 = inlined_call_operand.vmem [shape: bf16[32,64], index: 3, kind: input, shape index: {}]
  %s4 = inlined_call_operand.vmem [shape: f32[1,64], index: 4, kind: input, shape index: {}]
  %s5 = inlined_call_operand.vmem [shape: bf16[64,32], index: 5, kind: input, shape index: {}]
  %s6 = inlined_call_operand.vmem [shape: f32[1,32], index: 6, kind: input, shape index: {}]
  %s7 = inlined_call_operand.hbm [shape: f32[16,32], index: 7, kind: output, shape index: {}]
  %s8 = sld [smem:[#allocation0]]
  $region38: #{tpu_custom_call.1} parent=0
    _
  %s10 = ssub.s32 1, %s8
  %s11 = scalar_select 0, %s10, %s8
  $region1: #{tpu_custom_call.1} parent=0
    #allocation2 [shape = 'u8[8192]{0}', space=vmem, size = 0x2000, scoped, tag = 'output window, operand 0, single buffered']
    #allocation3 [shape = 's32[1]{0}', space=sflag, size = 0x4, scoped, tag = 'scoped memory for tpu_custom_call.1']
    %12 = vsyncpa [#allocation3], 0
    // Predicated region
    $region2: #{tpu_custom_call.1} parent=1 // pred_check
      _
    $region3: #{tpu_custom_call.1} parent=1 // pred_check_branch
      %14 = sbr.rel (0) target = $region5
    $region4: #{tpu_custom_call.1} parent=1 // pred_region
      _
    $region5: #{tpu_custom_call.1} parent=1 // pred_fallthru
      _
    // Predicated region
    $region6: #{tpu_custom_call.1} parent=1 // pred_check
      _
    $region7: #{tpu_custom_call.1} parent=1 // pred_check_branch
      %16 = sbr.rel (0) target = $region9
    $region8: #{tpu_custom_call.1} parent=1 // pred_region
      _
    $region9: #{tpu_custom_call.1} parent=1 // pred_fallthru
      _
    // Predicated region
    $region10: #{tpu_custom_call.1} parent=1 // pred_check
      _
    $region11: #{tpu_custom_call.1} parent=1 // pred_check_branch
      %18 = sbr.rel (0) target = $region13
    $region12: #{tpu_custom_call.1} parent=1 // pred_region
      _
    $region13: #{tpu_custom_call.1} parent=1 // pred_fallthru
      _
    // Predicated region
    $region14: #{tpu_custom_call.1} parent=1 // pred_check
      _
    $region15: #{tpu_custom_call.1} parent=1 // pred_check_branch
      %20 = sbr.rel (0) target = $region17
    $region16: #{tpu_custom_call.1} parent=1 // pred_region
      _
    $region17: #{tpu_custom_call.1} parent=1 // pred_fallthru
      _
    // Predicated region
    $region18: #{tpu_custom_call.1} parent=1 // pred_check
      _
    $region19: #{tpu_custom_call.1} parent=1 // pred_check_branch
      %22 = sbr.rel (0) target = $region21
    $region20: #{tpu_custom_call.1} parent=1 // pred_region
      _
    $region21: #{tpu_custom_call.1} parent=1 // pred_fallthru
      _
    // Predicated region
    $region22: #{tpu_custom_call.1} parent=1 // pred_check
      _
    $region23: #{tpu_custom_call.1} parent=1 // pred_check_branch
      %24 = sbr.rel (0) target = $region25
    $region24: #{tpu_custom_call.1} parent=1 // pred_region
      _
    $region25: #{tpu_custom_call.1} parent=1 // pred_fallthru
      _
    // Predicated region
    $region26: #{tpu_custom_call.1} parent=1 // pred_check
      _
    $region27: #{tpu_custom_call.1} parent=1 // pred_check_branch
      %26 = sbr.rel (0) target = $region29
    $region28: #{tpu_custom_call.1} parent=1 // pred_region
      _
    $region29: #{tpu_custom_call.1} parent=1 // pred_fallthru
      _
    %v28 = vld [vmem:[%s0] sm:$0xff]
    %v29 = vld [vmem:[%s0 + $0x8] sm:$0xff]
    %vm30 = vcmask 261120
    %v31 = vsel %vm30, %v28, 0.0
    %32 = vadd.xlane.f32.xlu0 %v31
    %v33 = vpop.xlane.xlu0 %32
    %v34 = vsel %vm30, %v29, 0.0
    %35 = vadd.xlane.f32.xlu0 %v34
    %v36 = vpop.xlane.xlu0 %35
    %v37 = vrcp.pop 32.0
    %v38 = vmul.f32 %v33, %v37
    %v39 = vmul.f32 %v36, %v37
    %v40 = vsub.f32 %v28, %v38
    %v41 = vsub.f32 %v29, %v39
    %v42 = vmul.f32 %v40, %v40
    %v43 = vmul.f32 %v41, %v41
    %v44 = vsel %vm30, %v42, 0.0
    %45 = vadd.xlane.f32.xlu0 %v44
    %v46 = vpop.xlane.xlu0 %45
    %v47 = vsel %vm30, %v43, 0.0
    %48 = vadd.xlane.f32.xlu0 %v47
    %v49 = vpop.xlane.xlu0 %48
    %v50 = vmul.f32 %v46, %v37
    %v51 = vmul.f32 %v49, %v37
    %v52 = vadd.f32 %v50, 1e-06
    %v53 = vadd.f32 %v51, 1e-06
    %v54 = vrsqrt.pop %v52
    %v55 = vrsqrt.pop %v53
    %v56 = vmul.f32 %v40, %v54
    %v57 = vmul.f32 %v41, %v55
    %v58 = vld [vmem:[%s1] sm:$0x1]
    %v60 = vlaneseq
    %v61 = vshrl.u32 %v60, 7
    %v62 = vsub.s32 0, %v61
    %v63 = vrot.slane %v58, %v62
    %v65 = vmul.f32 %v56, %v63
    %v66 = vmul.f32 %v57, %v63
    %v67 = vld [vmem:[%s2] sm:$0x1]
    %v69 = vlaneseq
    %v70 = vshrl.u32 %v69, 7
    %v71 = vsub.s32 0, %v70
    %v72 = vrot.slane %v67, %v71
    %v74 = vadd.f32 %v65, %v72
    %v75 = vadd.f32 %v66, %v72
    %v76 = vpack.c.bf16 %v75, %v74
    %v77 = vld [vmem:[%s3] sm:$0xf]
    %v78 = vld [vmem:[%s3 + $0x4] sm:$0xf]
    %v79 = vld [vmem:[%s3 + $0x8] sm:$0xf]
    %v80 = vld [vmem:[%s3 + $0xc] sm:$0xf]
    %v81 = vld [vmem:[%s4] sm:$0x1]
    %v83 = vlaneseq
    %v84 = vshrl.u32 %v83, 7
    %v85 = vsub.s32 0, %v84
    %v86 = vrot.slane %v81, %v85
    %v92 = vunpack.c.l.b16 %v77
    %v93 = vunpack.c.l.b16 %v78
    %v94 = vunpack.c.l.b16 %v79
    %v95 = vunpack.c.l.b16 %v80
    %v96 = vpack.c.b16 %v93, %v92
    %v97 = vpack.c.b16 %v95, %v94
    %v101 = vsel %vm30, %v76, 0
    %103 = vmatprep.subr.bf16.mxu0 0
    %104 = vmatpush1.bf16.msra.mxu0 0
    %105 = vmatprep.subr.bf16.mxu0 0
    %106 = vmatpush1.bf16.msra.mxu0 0
    %107 = vmatprep.subr.bf16.mxu0 0
    %108 = vmatpush1.bf16.msra.mxu0 0
    %109 = vmatprep.subr.bf16.mxu0 0
    %110 = vmatpush1.bf16.msra.mxu0 0
    %111 = vmatprep.subr.bf16.mxu0 0
    %112 = vmatpush1.bf16.msra.mxu0 0
    %113 = vmatprep.subr.bf16.mxu0 0
    %114 = vmatpush1.bf16.msra.mxu0 0
    %115 = vmatprep.subr.bf16.mxu0 0
    %116 = vmatpush1.bf16.msra.mxu0 %v97
    %117 = vmatprep.subr.bf16.mxu0 0
    %118 = vmatpush1.bf16.msra.mxu0 %v96
    %119 = vmatprep.subr.bf16.mxu0 0
    %120 = vmatpush2.bf16.msra.mxu0 0
    %121 = vmatprep.subr.bf16.mxu0 0
    %122 = vmatpush2.bf16.msra.mxu0 0
    %123 = vmatprep.subr.bf16.mxu0 0
    %124 = vmatpush2.bf16.msra.mxu0 0
    %125 = vmatprep.subr.bf16.mxu0 0
    %126 = vmatpush2.bf16.msra.mxu0 0
    %127 = vmatprep.subr.bf16.mxu0 0
    %128 = vmatpush2.bf16.msra.mxu0 0
    %129 = vmatprep.subr.bf16.mxu0 0
    %130 = vmatpush2.bf16.msra.mxu0 0
    %131 = vmatprep.subr.bf16.mxu0 0
    %132 = vmatpush2.bf16.msra.mxu0 0
    %133 = vmatprep.subr.bf16.mxu0 0
    %134 = vmatpush2.bf16.msra.mxu0 0
    %135 = vmatprep.mubr.bf16.mxu0 0
    %136 = vmatmul.mubr.bf16.gmra.mxu0 %v101
    %v137 = vpop.f32.mrf.mxu0
    %v138 = vadd.f32 %v86, %v137
    %v139 = vpop.f32.mrf.mxu0
    %v140 = vpop.f32.mrf.mxu0
    %v141 = vadd.f32 %v86, %v140
    %v142 = vpop.f32.mrf.mxu0
    %143 = vdwg.mxu0
    %v144 = vmax.f32 %v138, 0.0
    %v145 = vmax.f32 %v141, 0.0
    %v146 = vpack.c.bf16 %v145, %v144
    %v147 = vld [vmem:[%s5] sm:$0xf]
    %v148 = vld [vmem:[%s5 + $0x4] sm:$0xf]
    %v149 = vld [vmem:[%s5 + $0x8] sm:$0xf]
    %v150 = vld [vmem:[%s5 + $0xc] sm:$0xf]
    %v151 = vld [vmem:[%s5 + $0x10] sm:$0xf]
    %v152 = vld [vmem:[%s5 + $0x14] sm:$0xf]
    %v153 = vld [vmem:[%s5 + $0x18] sm:$0xf]
    %v154 = vld [vmem:[%s5 + $0x1c] sm:$0xf]
    %v155 = vld [vmem:[%s6] sm:$0x1]
    %v157 = vlaneseq
    %v158 = vshrl.u32 %v157, 7
    %v159 = vsub.s32 0, %v158
    %v160 = vrot.slane %v155, %v159
    %v170 = vunpack.c.l.b16 %v147
    %v171 = vunpack.c.l.b16 %v148
    %v172 = vunpack.c.l.b16 %v149
    %v173 = vunpack.c.l.b16 %v150
    %v174 = vunpack.c.l.b16 %v151
    %v175 = vunpack.c.l.b16 %v152
    %v176 = vunpack.c.l.b16 %v153
    %v177 = vunpack.c.l.b16 %v154
    %v178 = vpack.c.b16 %v171, %v170
    %v179 = vpack.c.b16 %v173, %v172
    %v180 = vpack.c.b16 %v175, %v174
    %v181 = vpack.c.b16 %v177, %v176
    %vm186 = vcmask 523264
    %v188 = vsel %vm186, %v146, 0
    %190 = vmatprep.subr.bf16.mxu0 0
    %191 = vmatpush1.bf16.msra.mxu0 0
    %192 = vmatprep.subr.bf16.mxu0 0
    %193 = vmatpush1.bf16.msra.mxu0 0
    %194 = vmatprep.subr.bf16.mxu0 0
    %195 = vmatpush1.bf16.msra.mxu0 0
    %196 = vmatprep.subr.bf16.mxu0 0
    %197 = vmatpush1.bf16.msra.mxu0 0
    %198 = vmatprep.subr.bf16.mxu0 0
    %199 = vmatpush1.bf16.msra.mxu0 %v181
    %200 = vmatprep.subr.bf16.mxu0 0
    %201 = vmatpush1.bf16.msra.mxu0 %v180
    %202 = vmatprep.subr.bf16.mxu0 0
    %203 = vmatpush1.bf16.msra.mxu0 %v179
    %204 = vmatprep.subr.bf16.mxu0 0
    %205 = vmatpush1.bf16.msra.mxu0 %v178
    %206 = vmatprep.subr.bf16.mxu0 0
    %207 = vmatpush2.bf16.msra.mxu0 0
    %208 = vmatprep.subr.bf16.mxu0 0
    %209 = vmatpush2.bf16.msra.mxu0 0
    %210 = vmatprep.subr.bf16.mxu0 0
    %211 = vmatpush2.bf16.msra.mxu0 0
    %212 = vmatprep.subr.bf16.mxu0 0
    %213 = vmatpush2.bf16.msra.mxu0 0
    %214 = vmatprep.subr.bf16.mxu0 0
    %215 = vmatpush2.bf16.msra.mxu0 0
    %216 = vmatprep.subr.bf16.mxu0 0
    %217 = vmatpush2.bf16.msra.mxu0 0
    %218 = vmatprep.subr.bf16.mxu0 0
    %219 = vmatpush2.bf16.msra.mxu0 0
    %220 = vmatprep.subr.bf16.mxu0 0
    %221 = vmatpush2.bf16.msra.mxu0 0
    %222 = vmatprep.mubr.bf16.mxu0 0
    %223 = vmatmul.mubr.bf16.gmra.mxu0 %v188
    %v224 = vpop.f32.mrf.mxu0
    %v225 = vadd.f32 %v160, %v224
    %v226 = vpop.f32.mrf.mxu0
    %v227 = vpop.f32.mrf.mxu0
    %v228 = vadd.f32 %v160, %v227
    %v229 = vpop.f32.mrf.mxu0
    %230 = vdwg.mxu0
    %v231 = vadd.f32 %v225, %v28
    %v232 = vadd.f32 %v228, %v29
    %233 = vst.msk [vmem:[#allocation2] sm:$0xff] %vm30, %v231
    %234 = vst.msk [vmem:[#allocation2 + $0x8] sm:$0xff] %vm30, %v232
    // Predicated region
    $region30: #{tpu_custom_call.1} parent=1 // pred_check
      _
    $region31: #{tpu_custom_call.1} parent=1 // pred_check_branch
      %236 = sbr.rel (0) target = $region33
    $region32: #{tpu_custom_call.1} parent=1 // pred_region
      %s238 = ssub.s32 256, 256
      %239 = vsyncadd [#allocation3], %s238
      %s240 = sshll.u32 [#allocation2], 4
      %s241 = int_to_ptr.vmem [resolvable:$true] %s240
      %246 = dma.vmem_to_hbm [thread:$0]  %s241, 256, %s7, [#allocation3], 128, 128, 8
    $region33: #{tpu_custom_call.1} parent=1 // pred_fallthru
      _
    // Predicated region
    $region34: #{tpu_custom_call.1} parent=1 // pred_check
      _
    $region35: #{tpu_custom_call.1} parent=1 // pred_check_branch
      %248 = sbr.rel (0) target = $region37
    $region36: #{tpu_custom_call.1} parent=1 // pred_region
      %249 = dma.done [#allocation3], 256
    $region37: #{tpu_custom_call.1} parent=1 // pred_fallthru
      _
    %250 = vsyncpa [#allocation3], 1

</llo_original>
